<compile_context>
chip_gen: v5e
topology: v5e:2x2
jax: 0.10.0
libtpu: 0.0.40
codegen_flags: <defaults>
</compile_context>

<pallas_src>
import jax
import jax.numpy as jnp
from jax import lax
from jax.experimental import pallas as pl
from jax.experimental.pallas import tpu as pltpu


def rnn_cls_kernel(idx_ref, emb_ref, wih_ref, whh_ref, wfc_ref, bfc_ref, out_ref):
    # idx_ref : [T*BP, 1] int32  time-major token ids (row t*BP + b = idx[b, t]; pad rows = 0)
    # emb_ref : [V, D]           embedding table
    # wih_ref : [D, H]           W_ih^T
    # whh_ref : [H, H]           W_hh^T
    # wfc_ref : [H, CP]          W_fc^T, zero-padded to CP lanes
    # bfc_ref : [1, CP]          fc bias, zero-padded
    # out_ref : [BP, CP]         padded logits
    emb = emb_ref[...]
    wih_t = wih_ref[...]
    whh_t = whh_ref[...]

    TB = idx_ref.shape[0]
    BP = out_ref.shape[0]
    T = TB // BP
    V = emb.shape[0]
    H = whh_t.shape[0]

    # (1) Hoisted input projection:  emb_proj[v] = emb[v] @ W_ih^T          [V, H]
    emb_proj = jnp.dot(emb, wih_t, preferred_element_type=jnp.float32)

    # (2) Gather + project ALL timesteps with a single one-hot matmul (MXU-friendly gather).
    onehot = (idx_ref[...] ==
              lax.broadcasted_iota(jnp.int32, (TB, V), 1)).astype(jnp.float32)  # [T*BP, V]
    xproj = jnp.dot(onehot, emb_proj, preferred_element_type=jnp.float32)       # [T*BP, H]

    # (3) Fully-unrolled recurrence: h_t = tanh(x_t W_ih^T + h_{t-1} W_hh^T)
    #     (PyTorch nn.RNN, tanh nonlinearity, bias=False). Slices below are static and
    #     sublane-aligned (offsets are multiples of BP, a multiple of 8).
    h = jnp.zeros((BP, H), jnp.float32)
    for t in range(T):
        x_t = xproj[t * BP:(t + 1) * BP, :]                                      # [BP, H]
        h = jnp.tanh(x_t + jnp.dot(h, whh_t, preferred_element_type=jnp.float32))

    # (4) fc epilogue on the last hidden state; lane-dense padded output store.
    out_ref[...] = (jnp.dot(h, wfc_ref[...], preferred_element_type=jnp.float32)
                    + bfc_ref[...])


def torch_rnn_forward(idx, emb, w_ih, w_hh, w_fc, b_fc):
    """Pallas wrapper.  Weights come in PyTorch convention; transposes/padding are glue."""
    B, T = idx.shape
    V, D = emb.shape
    H = w_hh.shape[0]
    C = w_fc.shape[0]

    BP = ((B + 7) // 8) * 8          # pad batch rows to a sublane multiple
    CP = 128                          # pad classes to a lane-dense width

    idx_pad = jnp.zeros((BP, T), jnp.int32).at[:B, :].set(jnp.asarray(idx, jnp.int32))
    idx_tb = idx_pad.T.reshape(T * BP, 1)                                   # time-major rows

    emb_f = jnp.asarray(emb, jnp.float32)                                   # [V, D]
    wih_t = jnp.asarray(w_ih, jnp.float32).T                                # [D, H]
    whh_t = jnp.asarray(w_hh, jnp.float32).T                                # [H, H]
    wfc_t = jnp.zeros((H, CP), jnp.float32).at[:, :C].set(
        jnp.asarray(w_fc, jnp.float32).T)                                   # [H, CP]
    bfc = jnp.zeros((1, CP), jnp.float32).at[:, :C].set(
        jnp.asarray(b_fc, jnp.float32).reshape(1, C))                       # [1, CP]

    flops = 2 * (V * D * H + T * BP * V * H + T * BP * H * H + BP * H * CP)
    bytes_accessed = 4 * (T * BP + V * D + D * H + H * H + H * CP + CP + BP * CP)
    cost = pl.CostEstimate(flops=flops,
                           transcendentals=T * BP * H,
                           bytes_accessed=bytes_accessed)

    vmem = pl.BlockSpec(memory_space=pltpu.MemorySpace.VMEM)
    out_padded = pl.pallas_call(
        rnn_cls_kernel,
        out_shape=jax.ShapeDtypeStruct((BP, CP), jnp.float32),
        in_specs=[vmem] * 6,
        out_specs=vmem,
        cost_estimate=cost,
    )(idx_tb, emb_f, wih_t, whh_t, wfc_t, bfc)

    return out_padded[:B, :C]


def reference_forward(idx, emb, w_ih, w_hh, w_fc, b_fc):
    """Pure-JAX reference matching PyTorch TorchRNN.forward(x, y=None)."""
    x = emb[idx]                               # [B, T, D]
    B, T, _ = x.shape
    H = w_hh.shape[0]
    h = jnp.zeros((B, H), jnp.float32)
    for t in range(T):
        h = jnp.tanh(x[:, t] @ w_ih.T + h @ w_hh.T)
    return h @ w_fc.T + b_fc[None, :]


if __name__ == "__main__":
    # Small shapes consistent with the module's forward.
    B, T = 2, 8              # batch, sequence length
    V = 30                   # len(vocab)
    D = 16                   # vector_dim
    H = 2 * D                # RNN hidden = 2 * vector_dim
    C = 5                    # num_classes

    key = jax.random.PRNGKey(0)
    k_idx, k_emb, k_ih, k_hh, k_fc, k_b = jax.random.split(key, 6)

    idx = jax.random.randint(k_idx, (B, T), 0, V, dtype=jnp.int32)
    emb = jax.random.normal(k_emb, (V, D), jnp.float32) * 0.5
    w_ih = jax.random.normal(k_ih, (H, D), jnp.float32) * (1.0 / jnp.sqrt(D))
    w_hh = jax.random.normal(k_hh, (H, H), jnp.float32) * (1.0 / jnp.sqrt(H))
    w_fc = jax.random.normal(k_fc, (C, H), jnp.float32) * (1.0 / jnp.sqrt(H))
    b_fc = jax.random.normal(k_b, (C,), jnp.float32) * 0.1

    out = torch_rnn_forward(idx, emb, w_ih, w_hh, w_fc, b_fc)
    out = jax.block_until_ready(out)

    ref = reference_forward(idx, emb, w_ih, w_hh, w_fc, b_fc)
    assert out.shape == (B, C)
    assert jnp.allclose(out, ref, atol=1e-4, rtol=1e-4), (out, ref)

    print("KERNEL_OK")
</pallas_src>

<mosaic_0001>
module attributes {stable_mosaic.version = 11 : i64} {
  func.func @rnn_cls_kernel(%arg0: memref<64x1xi32, #tpu.memory_space<vmem>>, %arg1: memref<30x16xf32, #tpu.memory_space<vmem>>, %arg2: memref<16x32xf32, #tpu.memory_space<vmem>>, %arg3: memref<32x32xf32, #tpu.memory_space<vmem>>, %arg4: memref<32x128xf32, #tpu.memory_space<vmem>>, %arg5: memref<1x128xf32, #tpu.memory_space<vmem>>, %arg6: memref<8x128xf32, #tpu.memory_space<vmem>>) attributes {dimension_semantics = [], scalar_prefetch = 0 : i64, scratch_operands = 0 : i64, tpu.core_type = #tpu.core_type<tc>} {
    %c0 = arith.constant 0 : index
    %c0_0 = arith.constant 0 : index
    %0 = vector.load %arg1[%c0, %c0_0] : memref<30x16xf32, #tpu.memory_space<vmem>>, vector<30x16xf32>
    %c0_1 = arith.constant 0 : index
    %c0_2 = arith.constant 0 : index
    %1 = vector.load %arg2[%c0_1, %c0_2] : memref<16x32xf32, #tpu.memory_space<vmem>>, vector<16x32xf32>
    %c0_3 = arith.constant 0 : index
    %c0_4 = arith.constant 0 : index
    %2 = vector.load %arg3[%c0_3, %c0_4] : memref<32x32xf32, #tpu.memory_space<vmem>>, vector<32x32xf32>
    %cst = arith.constant dense<0.000000e+00> : vector<30x32xf32>
    %3 = tpu.matmul %0, %1, %cst {dimension_numbers = #tpu.dot_dimension_numbers<[1], [0], [0], [1], [0, 0, 1, 1], [], []>} : vector<30x16xf32>, vector<16x32xf32>, vector<30x32xf32> -> vector<30x32xf32>
    %c0_5 = arith.constant 0 : index
    %c0_6 = arith.constant 0 : index
    %4 = vector.load %arg0[%c0_5, %c0_6] : memref<64x1xi32, #tpu.memory_space<vmem>>, vector<64x1xi32>
    %5 = tpu.iota {dimensions = array<i32: 1>} : vector<64x30xi32>
    %6 = vector.broadcast %4 : vector<64x1xi32> to vector<64x30xi32>
    %7 = arith.cmpi eq, %6, %5 : vector<64x30xi32>
    %8 = arith.extui %7 : vector<64x30xi1> to vector<64x30xi32>
    %9 = arith.sitofp %8 : vector<64x30xi32> to vector<64x30xf32>
    %cst_7 = arith.constant dense<0.000000e+00> : vector<64x32xf32>
    %10 = tpu.matmul %9, %3, %cst_7 {dimension_numbers = #tpu.dot_dimension_numbers<[1], [0], [0], [1], [0, 0, 1, 1], [], []>} : vector<64x30xf32>, vector<30x32xf32>, vector<64x32xf32> -> vector<64x32xf32>
    %cst_8 = arith.constant 0.000000e+00 : f32
    %11 = vector.broadcast %cst_8 : f32 to vector<8x32xf32>
    %12 = vector.extract_strided_slice %10 {offsets = [0, 0], sizes = [8, 32], strides = [1, 1]} : vector<64x32xf32> to vector<8x32xf32>
    %cst_9 = arith.constant dense<0.000000e+00> : vector<8x32xf32>
    %13 = tpu.matmul %11, %2, %cst_9 {dimension_numbers = #tpu.dot_dimension_numbers<[1], [0], [0], [1], [0, 0, 1, 1], [], []>} : vector<8x32xf32>, vector<32x32xf32>, vector<8x32xf32> -> vector<8x32xf32>
    %14 = arith.addf %12, %13 : vector<8x32xf32>
    %15 = math.tanh %14 : vector<8x32xf32>
    %16 = vector.extract_strided_slice %10 {offsets = [8, 0], sizes = [8, 32], strides = [1, 1]} : vector<64x32xf32> to vector<8x32xf32>
    %cst_10 = arith.constant dense<0.000000e+00> : vector<8x32xf32>
    %17 = tpu.matmul %15, %2, %cst_10 {dimension_numbers = #tpu.dot_dimension_numbers<[1], [0], [0], [1], [0, 0, 1, 1], [], []>} : vector<8x32xf32>, vector<32x32xf32>, vector<8x32xf32> -> vector<8x32xf32>
    %18 = arith.addf %16, %17 : vector<8x32xf32>
    %19 = math.tanh %18 : vector<8x32xf32>
    %20 = vector.extract_strided_slice %10 {offsets = [16, 0], sizes = [8, 32], strides = [1, 1]} : vector<64x32xf32> to vector<8x32xf32>
    %cst_11 = arith.constant dense<0.000000e+00> : vector<8x32xf32>
    %21 = tpu.matmul %19, %2, %cst_11 {dimension_numbers = #tpu.dot_dimension_numbers<[1], [0], [0], [1], [0, 0, 1, 1], [], []>} : vector<8x32xf32>, vector<32x32xf32>, vector<8x32xf32> -> vector<8x32xf32>
    %22 = arith.addf %20, %21 : vector<8x32xf32>
    %23 = math.tanh %22 : vector<8x32xf32>
    %24 = vector.extract_strided_slice %10 {offsets = [24, 0], sizes = [8, 32], strides = [1, 1]} : vector<64x32xf32> to vector<8x32xf32>
    %cst_12 = arith.constant dense<0.000000e+00> : vector<8x32xf32>
    %25 = tpu.matmul %23, %2, %cst_12 {dimension_numbers = #tpu.dot_dimension_numbers<[1], [0], [0], [1], [0, 0, 1, 1], [], []>} : vector<8x32xf32>, vector<32x32xf32>, vector<8x32xf32> -> vector<8x32xf32>
    %26 = arith.addf %24, %25 : vector<8x32xf32>
    %27 = math.tanh %26 : vector<8x32xf32>
    %28 = vector.extract_strided_slice %10 {offsets = [32, 0], sizes = [8, 32], strides = [1, 1]} : vector<64x32xf32> to vector<8x32xf32>
    %cst_13 = arith.constant dense<0.000000e+00> : vector<8x32xf32>
    %29 = tpu.matmul %27, %2, %cst_13 {dimension_numbers = #tpu.dot_dimension_numbers<[1], [0], [0], [1], [0, 0, 1, 1], [], []>} : vector<8x32xf32>, vector<32x32xf32>, vector<8x32xf32> -> vector<8x32xf32>
    %30 = arith.addf %28, %29 : vector<8x32xf32>
    %31 = math.tanh %30 : vector<8x32xf32>
    %32 = vector.extract_strided_slice %10 {offsets = [40, 0], sizes = [8, 32], strides = [1, 1]} : vector<64x32xf32> to vector<8x32xf32>
    %cst_14 = arith.constant dense<0.000000e+00> : vector<8x32xf32>
    %33 = tpu.matmul %31, %2, %cst_14 {dimension_numbers = #tpu.dot_dimension_numbers<[1], [0], [0], [1], [0, 0, 1, 1], [], []>} : vector<8x32xf32>, vector<32x32xf32>, vector<8x32xf32> -> vector<8x32xf32>
    %34 = arith.addf %32, %33 : vector<8x32xf32>
    %35 = math.tanh %34 : vector<8x32xf32>
    %36 = vector.extract_strided_slice %10 {offsets = [48, 0], sizes = [8, 32], strides = [1, 1]} : vector<64x32xf32> to vector<8x32xf32>
    %cst_15 = arith.constant dense<0.000000e+00> : vector<8x32xf32>
    %37 = tpu.matmul %35, %2, %cst_15 {dimension_numbers = #tpu.dot_dimension_numbers<[1], [0], [0], [1], [0, 0, 1, 1], [], []>} : vector<8x32xf32>, vector<32x32xf32>, vector<8x32xf32> -> vector<8x32xf32>
    %38 = arith.addf %36, %37 : vector<8x32xf32>
    %39 = math.tanh %38 : vector<8x32xf32>
    %40 = vector.extract_strided_slice %10 {offsets = [56, 0], sizes = [8, 32], strides = [1, 1]} : vector<64x32xf32> to vector<8x32xf32>
    %cst_16 = arith.constant dense<0.000000e+00> : vector<8x32xf32>
    %41 = tpu.matmul %39, %2, %cst_16 {dimension_numbers = #tpu.dot_dimension_numbers<[1], [0], [0], [1], [0, 0, 1, 1], [], []>} : vector<8x32xf32>, vector<32x32xf32>, vector<8x32xf32> -> vector<8x32xf32>
    %42 = arith.addf %40, %41 : vector<8x32xf32>
    %43 = math.tanh %42 : vector<8x32xf32>
    %c0_17 = arith.constant 0 : index
    %c0_18 = arith.constant 0 : index
    %44 = vector.load %arg4[%c0_17, %c0_18] : memref<32x128xf32, #tpu.memory_space<vmem>>, vector<32x128xf32>
    %cst_19 = arith.constant dense<0.000000e+00> : vector<8x128xf32>
    %45 = tpu.matmul %43, %44, %cst_19 {dimension_numbers = #tpu.dot_dimension_numbers<[1], [0], [0], [1], [0, 0, 1, 1], [], []>} : vector<8x32xf32>, vector<32x128xf32>, vector<8x128xf32> -> vector<8x128xf32>
    %c0_20 = arith.constant 0 : index
    %c0_21 = arith.constant 0 : index
    %46 = vector.load %arg5[%c0_20, %c0_21] : memref<1x128xf32, #tpu.memory_space<vmem>>, vector<1x128xf32>
    %47 = vector.broadcast %46 : vector<1x128xf32> to vector<8x128xf32>
    %48 = arith.addf %45, %47 : vector<8x128xf32>
    %c0_22 = arith.constant 0 : index
    %c0_23 = arith.constant 0 : index
    %49 = vector.load %arg6[%c0_22, %c0_23] : memref<8x128xf32, #tpu.memory_space<vmem>>, vector<8x128xf32>
    tpu.vector_store %arg6[%c0_22, %c0_23], %48 {strides = array<i32>} : memref<8x128xf32, #tpu.memory_space<vmem>>, vector<8x128xf32>,
    return
  }
}

</mosaic_0001>

<llo_original>
// kernel: tpu_custom_call.1
$region0: #{tpu_custom_call.1}
  #allocation0 [shape = 'u32[]', space=smem, size = 0x4, offset = 0x4, fixed_abs, tag = 'smem constant byte address 0x4 - core index']
  #allocation1 [shape = 'u32[72,128]{1,0:T(1,128)}', space=vmem, size = 0x9000, scoped, tag = 'internal scratch']
  %s0 = inlined_call_operand.vmem [shape: s32[64,1], index: 0, kind: input, shape index: {}]
  %s1 = inlined_call_operand.vmem [shape: f32[30,16], index: 1, kind: input, shape index: {}]
  %s2 = inlined_call_operand.vmem [shape: f32[16,32], index: 2, kind: input, shape index: {}]
  %s3 = inlined_call_operand.vmem [shape: f32[32,32], index: 3, kind: input, shape index: {}]
  %s4 = inlined_call_operand.vmem [shape: f32[32,128], index: 4, kind: input, shape index: {}]
  %s5 = inlined_call_operand.vmem [shape: f32[1,128], index: 5, kind: input, shape index: {}]
  %s6 = inlined_call_operand.hbm [shape: f32[8,128], index: 6, kind: output, shape index: {}]
  %s7 = sld [smem:[#allocation0]]
  $region34: #{tpu_custom_call.1} parent=0
    _
  %s9 = ssub.s32 1, %s7
  %s10 = scalar_select 0, %s9, %s7
  $region1: #{tpu_custom_call.1} parent=0
    #allocation2 [shape = 'u8[4096]{0}', space=vmem, size = 0x1000, scoped, tag = 'output window, operand 0, single buffered']
    #allocation3 [shape = 's32[1]{0}', space=sflag, size = 0x4, scoped, tag = 'scoped memory for tpu_custom_call.1']
    %11 = vsyncpa [#allocation3], 0
    // Predicated region
    $region2: #{tpu_custom_call.1} parent=1 // pred_check
      _
    $region3: #{tpu_custom_call.1} parent=1 // pred_check_branch
      %13 = sbr.rel (0) target = $region5
    $region4: #{tpu_custom_call.1} parent=1 // pred_region
      _
    $region5: #{tpu_custom_call.1} parent=1 // pred_fallthru
      _
    // Predicated region
    $region6: #{tpu_custom_call.1} parent=1 // pred_check
      _
    $region7: #{tpu_custom_call.1} parent=1 // pred_check_branch
      %15 = sbr.rel (0) target = $region9
    $region8: #{tpu_custom_call.1} parent=1 // pred_region
      _
    $region9: #{tpu_custom_call.1} parent=1 // pred_fallthru
      _
    // Predicated region
    $region10: #{tpu_custom_call.1} parent=1 // pred_check
      _
    $region11: #{tpu_custom_call.1} parent=1 // pred_check_branch
      %17 = sbr.rel (0) target = $region13
    $region12: #{tpu_custom_call.1} parent=1 // pred_region
      _
    $region13: #{tpu_custom_call.1} parent=1 // pred_fallthru
      _
    // Predicated region
    $region14: #{tpu_custom_call.1} parent=1 // pred_check
      _
    $region15: #{tpu_custom_call.1} parent=1 // pred_check_branch
      %19 = sbr.rel (0) target = $region17
    $region16: #{tpu_custom_call.1} parent=1 // pred_region
      _
    $region17: #{tpu_custom_call.1} parent=1 // pred_fallthru
      _
    // Predicated region
    $region18: #{tpu_custom_call.1} parent=1 // pred_check
      _
    $region19: #{tpu_custom_call.1} parent=1 // pred_check_branch
      %21 = sbr.rel (0) target = $region21
    $region20: #{tpu_custom_call.1} parent=1 // pred_region
      _
    $region21: #{tpu_custom_call.1} parent=1 // pred_fallthru
      _
    // Predicated region
    $region22: #{tpu_custom_call.1} parent=1 // pred_check
      _
    $region23: #{tpu_custom_call.1} parent=1 // pred_check_branch
      %23 = sbr.rel (0) target = $region25
    $region24: #{tpu_custom_call.1} parent=1 // pred_region
      _
    $region25: #{tpu_custom_call.1} parent=1 // pred_fallthru
      _
    %v24 = vld [vmem:[%s1] sm:$0xff]
    %v25 = vld [vmem:[%s1 + $0x8] sm:$0xff]
    %v26 = vld [vmem:[%s1 + $0x10] sm:$0xff]
    %v27 = vld [vmem:[%s1 + $0x18] sm:$0x3f]
    %v28 = vld [vmem:[%s2] sm:$0xff]
    %v29 = vld [vmem:[%s2 + $0x8] sm:$0xff]
    %v30 = vld [vmem:[%s3] sm:$0xff]
    %v31 = vld [vmem:[%s3 + $0x8] sm:$0xff]
    %v32 = vld [vmem:[%s3 + $0x10] sm:$0xff]
    %v33 = vld [vmem:[%s3 + $0x18] sm:$0xff]
    %vm34 = vcmask 130048
    %v36 = vsel %vm34, %v24, 0
    %v39 = vsel %vm34, %v25, 0
    %v42 = vsel %vm34, %v26, 0
    %v45 = vsel %vm34, %v27, 0
    %47 = vmatpush.msra.mxu0 0.0
    %48 = vmatpush.msra.mxu0 0.0
    %49 = vmatpush.msra.mxu0 0.0
    %50 = vmatpush.msra.mxu0 0.0
    %51 = vmatpush.msra.mxu0 0.0
    %52 = vmatpush.msra.mxu0 0.0
    %53 = vmatpush.msra.mxu0 0.0
    %54 = vmatpush.msra.mxu0 0.0
    %55 = vmatpush.msra.mxu0 0.0
    %56 = vmatpush.msra.mxu0 0.0
    %57 = vmatpush.msra.mxu0 0.0
    %58 = vmatpush.msra.mxu0 0.0
    %59 = vmatpush.msra.mxu0 0.0
    %60 = vmatpush.msra.mxu0 0.0
    %61 = vmatpush.msra.mxu0 %v29
    %62 = vmatpush.msra.mxu0 %v28
    %63 = vmatmul.f32.gmra.mxu0 %v36
    %v64 = vpop.f32.mrf.mxu0
    %v65 = vadd.f32 0.0, %v64
    %66 = vmatmul.f32.gmra.mxu0 %v39
    %v67 = vpop.f32.mrf.mxu0
    %v68 = vadd.f32 0.0, %v67
    %69 = vmatmul.f32.gmra.mxu0 %v42
    %v70 = vpop.f32.mrf.mxu0
    %v71 = vadd.f32 0.0, %v70
    %72 = vmatmul.f32.gmra.mxu0 %v45
    %v73 = vpop.f32.mrf.mxu0
    %v74 = vadd.f32 0.0, %v73
    %75 = vdwg.mxu0
    %v76 = vld [vmem:[%s0] sm:$0xff]
    %v77 = vld [vmem:[%s0 + $0x8] sm:$0xff]
    %v78 = vld [vmem:[%s0 + $0x10] sm:$0xff]
    %v79 = vld [vmem:[%s0 + $0x18] sm:$0xff]
    %v80 = vld [vmem:[%s0 + $0x20] sm:$0xff]
    %v81 = vld [vmem:[%s0 + $0x28] sm:$0xff]
    %v82 = vld [vmem:[%s0 + $0x30] sm:$0xff]
    %v83 = vld [vmem:[%s0 + $0x38] sm:$0xff]
    %v84 = vlaneseq
    %v85 = vand.u32 %v84, 127
    %86 = vset.pattern.permute.xlu0 0
    %87 = vperm.xlu0 %86, %v76
    %v88 = vpop.permute.xlu0 %87
    %89 = vset.pattern.permute.xlu0 0
    %90 = vperm.xlu0 %89, %v77
    %v91 = vpop.permute.xlu0 %90
    %92 = vset.pattern.permute.xlu0 0
    %93 = vperm.xlu0 %92, %v78
    %v94 = vpop.permute.xlu0 %93
    %95 = vset.pattern.permute.xlu0 0
    %96 = vperm.xlu0 %95, %v79
    %v97 = vpop.permute.xlu0 %96
    %98 = vset.pattern.permute.xlu0 0
    %99 = vperm.xlu0 %98, %v80
    %v100 = vpop.permute.xlu0 %99
    %101 = vset.pattern.permute.xlu0 0
    %102 = vperm.xlu0 %101, %v81
    %v103 = vpop.permute.xlu0 %102
    %104 = vset.pattern.permute.xlu0 0
    %105 = vperm.xlu0 %104, %v82
    %v106 = vpop.permute.xlu0 %105
    %107 = vset.pattern.permute.xlu0 0
    %108 = vperm.xlu0 %107, %v83
    %v109 = vpop.permute.xlu0 %108
    %vm110 = vcmp.eq.s32.totalorder %v88, %v85
    %vm111 = vcmp.eq.s32.totalorder %v91, %v85
    %vm112 = vcmp.eq.s32.totalorder %v94, %v85
    %vm113 = vcmp.eq.s32.totalorder %v97, %v85
    %vm114 = vcmp.eq.s32.totalorder %v100, %v85
    %vm115 = vcmp.eq.s32.totalorder %v103, %v85
    %vm116 = vcmp.eq.s32.totalorder %v106, %v85
    %vm117 = vcmp.eq.s32.totalorder %v109, %v85
    %v118 = vsel %vm110, 1, 0
    %v119 = vsel %vm111, 1, 0
    %v120 = vsel %vm112, 1, 0
    %v121 = vsel %vm113, 1, 0
    %v122 = vsel %vm114, 1, 0
    %v123 = vsel %vm115, 1, 0
    %v124 = vsel %vm116, 1, 0
    %v125 = vsel %vm117, 1, 0
    %v126 = vcvt.s32.f32 %v118
    %v127 = vcvt.s32.f32 %v119
    %v128 = vcvt.s32.f32 %v120
    %v129 = vcvt.s32.f32 %v121
    %v130 = vcvt.s32.f32 %v122
    %v131 = vcvt.s32.f32 %v123
    %v132 = vcvt.s32.f32 %v124
    %v133 = vcvt.s32.f32 %v125
    %vm134 = vcmask 244736
    %v136 = vsel %vm134, %v126, 0
    %v139 = vsel %vm134, %v127, 0
    %v142 = vsel %vm134, %v128, 0
    %v145 = vsel %vm134, %v129, 0
    %v148 = vsel %vm134, %v130, 0
    %v151 = vsel %vm134, %v131, 0
    %v154 = vsel %vm134, %v132, 0
    %v157 = vsel %vm134, %v133, 0
    %vm159 = vcmask 1045504
    %v161 = vsel %vm159, %v74, 0
    %163 = vmatpush.msra.mxu0 0.0
    %164 = vmatpush.msra.mxu0 0.0
    %165 = vmatpush.msra.mxu0 0.0
    %166 = vmatpush.msra.mxu0 0.0
    %167 = vmatpush.msra.mxu0 0.0
    %168 = vmatpush.msra.mxu0 0.0
    %169 = vmatpush.msra.mxu0 0.0
    %170 = vmatpush.msra.mxu0 0.0
    %171 = vmatpush.msra.mxu0 0.0
    %172 = vmatpush.msra.mxu0 0.0
    %173 = vmatpush.msra.mxu0 0.0
    %174 = vmatpush.msra.mxu0 0.0
    %175 = vmatpush.msra.mxu0 %v161
    %176 = vmatpush.msra.mxu0 %v71
    %177 = vmatpush.msra.mxu0 %v68
    %178 = vmatpush.msra.mxu0 %v65
    %179 = vmatmul.f32.gmra.mxu0 %v136
    %v180 = vpop.f32.mrf.mxu0
    %v181 = vadd.f32 0.0, %v180
    %182 = vmatmul.f32.gmra.mxu0 %v139
    %v183 = vpop.f32.mrf.mxu0
    %v184 = vadd.f32 0.0, %v183
    %185 = vmatmul.f32.gmra.mxu0 %v142
    %v186 = vpop.f32.mrf.mxu0
    %v187 = vadd.f32 0.0, %v186
    %188 = vmatmul.f32.gmra.mxu0 %v145
    %v189 = vpop.f32.mrf.mxu0
    %v190 = vadd.f32 0.0, %v189
    %191 = vmatmul.f32.gmra.mxu0 %v148
    %v192 = vpop.f32.mrf.mxu0
    %v193 = vadd.f32 0.0, %v192
    %194 = vmatmul.f32.gmra.mxu0 %v151
    %v195 = vpop.f32.mrf.mxu0
    %v196 = vadd.f32 0.0, %v195
    %197 = vmatmul.f32.gmra.mxu0 %v154
    %v198 = vpop.f32.mrf.mxu0
    %v199 = vadd.f32 0.0, %v198
    %200 = vmatmul.f32.gmra.mxu0 %v157
    %v201 = vpop.f32.mrf.mxu0
    %v202 = vadd.f32 0.0, %v201
    %203 = vdwg.mxu0
    %vm204 = vcmask 261120
    %v206 = vsel %vm204, 0.0, 0
    %208 = vmatpush.msra.mxu0 0.0
    %209 = vmatpush.msra.mxu0 0.0
    %210 = vmatpush.msra.mxu0 0.0
    %211 = vmatpush.msra.mxu0 0.0
    %212 = vmatpush.msra.mxu0 0.0
    %213 = vmatpush.msra.mxu0 0.0
    %214 = vmatpush.msra.mxu0 0.0
    %215 = vmatpush.msra.mxu0 0.0
    %216 = vmatpush.msra.mxu0 0.0
    %217 = vmatpush.msra.mxu0 0.0
    %218 = vmatpush.msra.mxu0 0.0
    %219 = vmatpush.msra.mxu0 0.0
    %220 = vmatpush.msra.mxu0 %v33
    %221 = vmatpush.msra.mxu0 %v32
    %222 = vmatpush.msra.mxu0 %v31
    %223 = vmatpush.msra.mxu0 %v30
    %224 = vmatmul.f32.gmra.mxu0 %v206
    %v225 = vpop.f32.mrf.mxu0
    %v226 = vadd.f32 0.0, %v225
    %227 = vdwg.mxu0
    %v228 = vadd.f32 %v181, %v226
    %v229 = vtanh.pop %v228
    %v231 = vsel %vm204, %v229, 0
    %233 = vmatpush.msra.mxu0 0.0
    %234 = vmatpush.msra.mxu0 0.0
    %235 = vmatpush.msra.mxu0 0.0
    %236 = vmatpush.msra.mxu0 0.0
    %237 = vmatpush.msra.mxu0 0.0
    %238 = vmatpush.msra.mxu0 0.0
    %239 = vmatpush.msra.mxu0 0.0
    %240 = vmatpush.msra.mxu0 0.0
    %241 = vmatpush.msra.mxu0 0.0
    %242 = vmatpush.msra.mxu0 0.0
    %243 = vmatpush.msra.mxu0 0.0
    %244 = vmatpush.msra.mxu0 0.0
    %245 = vmatpush.msra.mxu0 %v33
    %246 = vmatpush.msra.mxu0 %v32
    %247 = vmatpush.msra.mxu0 %v31
    %248 = vmatpush.msra.mxu0 %v30
    %249 = vmatmul.f32.gmra.mxu0 %v231
    %v250 = vpop.f32.mrf.mxu0
    %v251 = vadd.f32 0.0, %v250
    %252 = vdwg.mxu0
    %v253 = vadd.f32 %v184, %v251
    %v254 = vtanh.pop %v253
    %v256 = vsel %vm204, %v254, 0
    %258 = vmatpush.msra.mxu0 0.0
    %259 = vmatpush.msra.mxu0 0.0
    %260 = vmatpush.msra.mxu0 0.0
    %261 = vmatpush.msra.mxu0 0.0
    %262 = vmatpush.msra.mxu0 0.0
    %263 = vmatpush.msra.mxu0 0.0
    %264 = vmatpush.msra.mxu0 0.0
    %265 = vmatpush.msra.mxu0 0.0
    %266 = vmatpush.msra.mxu0 0.0
    %267 = vmatpush.msra.mxu0 0.0
    %268 = vmatpush.msra.mxu0 0.0
    %269 = vmatpush.msra.mxu0 0.0
    %270 = vmatpush.msra.mxu0 %v33
    %271 = vmatpush.msra.mxu0 %v32
    %272 = vmatpush.msra.mxu0 %v31
    %273 = vmatpush.msra.mxu0 %v30
    %274 = vmatmul.f32.gmra.mxu0 %v256
    %v275 = vpop.f32.mrf.mxu0
    %v276 = vadd.f32 0.0, %v275
    %277 = vdwg.mxu0
    %v278 = vadd.f32 %v187, %v276
    %v279 = vtanh.pop %v278
    %v281 = vsel %vm204, %v279, 0
    %283 = vmatpush.msra.mxu0 0.0
    %284 = vmatpush.msra.mxu0 0.0
    %285 = vmatpush.msra.mxu0 0.0
    %286 = vmatpush.msra.mxu0 0.0
    %287 = vmatpush.msra.mxu0 0.0
    %288 = vmatpush.msra.mxu0 0.0
    %289 = vmatpush.msra.mxu0 0.0
    %290 = vmatpush.msra.mxu0 0.0
    %291 = vmatpush.msra.mxu0 0.0
    %292 = vmatpush.msra.mxu0 0.0
    %293 = vmatpush.msra.mxu0 0.0
    %294 = vmatpush.msra.mxu0 0.0
    %295 = vmatpush.msra.mxu0 %v33
    %296 = vmatpush.msra.mxu0 %v32
    %297 = vmatpush.msra.mxu0 %v31
    %298 = vmatpush.msra.mxu0 %v30
    %299 = vmatmul.f32.gmra.mxu0 %v281
    %v300 = vpop.f32.mrf.mxu0
    %v301 = vadd.f32 0.0, %v300
    %302 = vdwg.mxu0
    %v303 = vadd.f32 %v190, %v301
    %v304 = vtanh.pop %v303
    %v306 = vsel %vm204, %v304, 0
    %308 = vmatpush.msra.mxu0 0.0
    %309 = vmatpush.msra.mxu0 0.0
    %310 = vmatpush.msra.mxu0 0.0
    %311 = vmatpush.msra.mxu0 0.0
    %312 = vmatpush.msra.mxu0 0.0
    %313 = vmatpush.msra.mxu0 0.0
    %314 = vmatpush.msra.mxu0 0.0
    %315 = vmatpush.msra.mxu0 0.0
    %316 = vmatpush.msra.mxu0 0.0
    %317 = vmatpush.msra.mxu0 0.0
    %318 = vmatpush.msra.mxu0 0.0
    %319 = vmatpush.msra.mxu0 0.0
    %320 = vmatpush.msra.mxu0 %v33
    %321 = vmatpush.msra.mxu0 %v32
    %322 = vmatpush.msra.mxu0 %v31
    %323 = vmatpush.msra.mxu0 %v30
    %324 = vmatmul.f32.gmra.mxu0 %v306
    %v325 = vpop.f32.mrf.mxu0
    %v326 = vadd.f32 0.0, %v325
    %327 = vdwg.mxu0
    %v328 = vadd.f32 %v193, %v326
    %v329 = vtanh.pop %v328
    %v331 = vsel %vm204, %v329, 0
    %333 = vmatpush.msra.mxu0 0.0
    %334 = vmatpush.msra.mxu0 0.0
    %335 = vmatpush.msra.mxu0 0.0
    %336 = vmatpush.msra.mxu0 0.0
    %337 = vmatpush.msra.mxu0 0.0
    %338 = vmatpush.msra.mxu0 0.0
    %339 = vmatpush.msra.mxu0 0.0
    %340 = vmatpush.msra.mxu0 0.0
    %341 = vmatpush.msra.mxu0 0.0
    %342 = vmatpush.msra.mxu0 0.0
    %343 = vmatpush.msra.mxu0 0.0
    %344 = vmatpush.msra.mxu0 0.0
    %345 = vmatpush.msra.mxu0 %v33
    %346 = vmatpush.msra.mxu0 %v32
    %347 = vmatpush.msra.mxu0 %v31
    %348 = vmatpush.msra.mxu0 %v30
    %349 = vmatmul.f32.gmra.mxu0 %v331
    %v350 = vpop.f32.mrf.mxu0
    %v351 = vadd.f32 0.0, %v350
    %352 = vdwg.mxu0
    %v353 = vadd.f32 %v196, %v351
    %v354 = vtanh.pop %v353
    %v356 = vsel %vm204, %v354, 0
    %358 = vmatpush.msra.mxu0 0.0
    %359 = vmatpush.msra.mxu0 0.0
    %360 = vmatpush.msra.mxu0 0.0
    %361 = vmatpush.msra.mxu0 0.0
    %362 = vmatpush.msra.mxu0 0.0
    %363 = vmatpush.msra.mxu0 0.0
    %364 = vmatpush.msra.mxu0 0.0
    %365 = vmatpush.msra.mxu0 0.0
    %366 = vmatpush.msra.mxu0 0.0
    %367 = vmatpush.msra.mxu0 0.0
    %368 = vmatpush.msra.mxu0 0.0
    %369 = vmatpush.msra.mxu0 0.0
    %370 = vmatpush.msra.mxu0 %v33
    %371 = vmatpush.msra.mxu0 %v32
    %372 = vmatpush.msra.mxu0 %v31
    %373 = vmatpush.msra.mxu0 %v30
    %374 = vmatmul.f32.gmra.mxu0 %v356
    %v375 = vpop.f32.mrf.mxu0
    %v376 = vadd.f32 0.0, %v375
    %377 = vdwg.mxu0
    %v378 = vadd.f32 %v199, %v376
    %v379 = vtanh.pop %v378
    %v381 = vsel %vm204, %v379, 0
    %383 = vmatpush.msra.mxu0 0.0
    %384 = vmatpush.msra.mxu0 0.0
    %385 = vmatpush.msra.mxu0 0.0
    %386 = vmatpush.msra.mxu0 0.0
    %387 = vmatpush.msra.mxu0 0.0
    %388 = vmatpush.msra.mxu0 0.0
    %389 = vmatpush.msra.mxu0 0.0
    %390 = vmatpush.msra.mxu0 0.0
    %391 = vmatpush.msra.mxu0 0.0
    %392 = vmatpush.msra.mxu0 0.0
    %393 = vmatpush.msra.mxu0 0.0
    %394 = vmatpush.msra.mxu0 0.0
    %395 = vmatpush.msra.mxu0 %v33
    %396 = vmatpush.msra.mxu0 %v32
    %397 = vmatpush.msra.mxu0 %v31
    %398 = vmatpush.msra.mxu0 %v30
    %399 = vmatmul.f32.gmra.mxu0 %v381
    %v400 = vpop.f32.mrf.mxu0
    %v401 = vadd.f32 0.0, %v400
    %402 = vdwg.mxu0
    %v403 = vadd.f32 %v202, %v401
    %v404 = vtanh.pop %v403
    %v405 = vld [vmem:[%s4] sm:$0xff]
    %v406 = vld [vmem:[%s4 + $0x8] sm:$0xff]
    %v407 = vld [vmem:[%s4 + $0x10] sm:$0xff]
    %v408 = vld [vmem:[%s4 + $0x18] sm:$0xff]
    %v409 = vld [vmem:[%s5] sm:$0x1]
    %v411 = vperm.slane %v409, 0
    %v414 = vsel %vm204, %v404, 0
    %416 = vmatpush.msra.mxu0 0.0
    %417 = vmatpush.msra.mxu0 0.0
    %418 = vmatpush.msra.mxu0 0.0
    %419 = vmatpush.msra.mxu0 0.0
    %420 = vmatpush.msra.mxu0 0.0
    %421 = vmatpush.msra.mxu0 0.0
    %422 = vmatpush.msra.mxu0 0.0
    %423 = vmatpush.msra.mxu0 0.0
    %424 = vmatpush.msra.mxu0 0.0
    %425 = vmatpush.msra.mxu0 0.0
    %426 = vmatpush.msra.mxu0 0.0
    %427 = vmatpush.msra.mxu0 0.0
    %428 = vmatpush.msra.mxu0 %v408
    %429 = vmatpush.msra.mxu0 %v407
    %430 = vmatpush.msra.mxu0 %v406
    %431 = vmatpush.msra.mxu0 %v405
    %432 = vmatmul.f32.gmra.mxu0 %v414
    %v433 = vpop.f32.mrf.mxu0
    %v434 = vadd.f32 %v411, %v433
    %435 = vdwg.mxu0
    %436 = vst [vmem:[#allocation2] sm:$0xff] %v434
    // Predicated region
    $region26: #{tpu_custom_call.1} parent=1 // pred_check
      _
    $region27: #{tpu_custom_call.1} parent=1 // pred_check_branch
      %438 = sbr.rel (0) target = $region29
    $region28: #{tpu_custom_call.1} parent=1 // pred_region
      %440 = vsyncadd [#allocation3], 0
      %s442 = sshll.u32 [#allocation2], 4
      %s443 = int_to_ptr.vmem [resolvable:$true] %s442
      %s444 = sshll.u32 %s6, 4
      %s445 = int_to_ptr.hbm [resolvable:$true] %s444
      %447 = dma.vmem_to_hbm [thread:$0]  %s443, 128, %s445, [#allocation3]
    $region29: #{tpu_custom_call.1} parent=1 // pred_fallthru
      _
    // Predicated region
    $region30: #{tpu_custom_call.1} parent=1 // pred_check
      _
    $region31: #{tpu_custom_call.1} parent=1 // pred_check_branch
      %449 = sbr.rel (0) target = $region33
    $region32: #{tpu_custom_call.1} parent=1 // pred_region
      %451 = dma.done [#allocation3], 128
    $region33: #{tpu_custom_call.1} parent=1 // pred_fallthru
      _
    %452 = vsyncpa [#allocation3], 1

</llo_original>
